<compile_context>
chip_gen: v7x
topology: tpu7x:2x2x1
jax: 0.10.0
libtpu: 0.0.40
codegen_flags: <defaults>
</compile_context>

<pallas_src>
import math

import jax
import jax.numpy as jnp
import numpy as np
from jax.experimental import pallas as pl
from jax.experimental.pallas import tpu as pltpu


def _biased_pe_kernel(interval_ref, wt_ref, arc_ref, out_ref):
    # interval_ref: (B, Lb, 1)           per-batch time intervals
    # wt_ref:       (1, 1, 2*D2)         0.5 * tile(Wt, 2)   (sigmoid's z/2 folded in)
    # arc_ref:      (1, Lb, 2*D2)        tile(pos*div, 2) + [0, pi/2] phase + 0.5
    # out_ref:      (B, Lb, 2*D2)
    #
    # sigmoid(z) = 0.5 + 0.5*tanh(z/2); z/2 lives in wt_ref, +0.5 lives in arc_ref.
    phi_half = 0.5 * jnp.tanh(interval_ref[...] * wt_ref[...])   # tanh -> EUP slot
    # cos(x) = sin(x + pi/2): the whole (sin | cos) output is one sin over a
    # lane-dense tile -> single unmasked store.
    out_ref[...] = jnp.sin(arc_ref[...] + phi_half)


def biased_positional_embedding(interval, wt_weight, position, div_term, *, l_block=None):
    """interval: (B, L) or (L,) f32; wt_weight: (D2, 1) f32 (torch Linear layout);
    position: (max_len, 1) f32; div_term: (D2,) f32. Returns (B, L, 2*D2) f32
    (B = 1 if interval is 1-D, matching the torch module's broadcast)."""
    interval = jnp.asarray(interval, jnp.float32)
    if interval.ndim == 1:                       # torch module's 1-D path
        interval = interval[None, :]
    B, L = interval.shape
    D2 = wt_weight.shape[0]
    D = 2 * D2

    # ---- batch-invariant, lane-dense constants (computed once, wrapper-side) ----
    arc = position[:L].astype(jnp.float32) * div_term.astype(jnp.float32)[None, :]  # (L, D2)
    arc_full = jnp.concatenate(
        [arc, arc + jnp.float32(math.pi / 2.0)], axis=-1
    ) + jnp.float32(0.5)                                                             # (L, D)
    arc_full = arc_full.reshape(1, L, D)
    wt_half = (0.5 * jnp.tile(wt_weight.astype(jnp.float32).reshape(-1), 2)).reshape(1, 1, D)
    interval3 = interval.reshape(B, L, 1)

    # ---- L tiling: one block while small, ~0.5 MiB output blocks at scale ----
    if l_block is None:
        max_out_elems = (512 * 1024) // 4        # ~0.5 MiB of f32 per output block
        if B * L * D <= max_out_elems:
            l_block = L                          # whole array = one grid point
        else:
            l_block = min(L, max(8, (max_out_elems // (B * D)) // 8 * 8))
    num_l = pl.cdiv(L, l_block)

    return pl.pallas_call(
        _biased_pe_kernel,
        out_shape=jax.ShapeDtypeStruct((B, L, D), jnp.float32),
        grid=(num_l,),
        in_specs=[
            pl.BlockSpec((B, l_block, 1), lambda l: (0, l, 0)),
            pl.BlockSpec((1, 1, D), lambda l: (0, 0, 0)),
            pl.BlockSpec((1, l_block, D), lambda l: (0, l, 0)),
        ],
        out_specs=pl.BlockSpec((B, l_block, D), lambda l: (0, l, 0)),
        compiler_params=pltpu.CompilerParams(dimension_semantics=("parallel",)),
    )(interval3, wt_half, arc_full)


def _reference(interval, wt_weight, position, div_term):
    # Pure-JAX mirror of the torch module.
    phi = jax.nn.sigmoid(interval[..., None] * wt_weight[:, 0])   # (B, L, D2)
    L = interval.shape[-1]
    arc = (position[:L] * div_term)[None, :, :]                   # (1, L, D2)
    return jnp.concatenate([jnp.sin(arc + phi), jnp.cos(arc + phi)], axis=-1)


if __name__ == "__main__":
    # opt = {'biased_position_dim': 32, 'position_dim': 32}
    biased_position_dim = 32
    position_dim = 32
    max_len = 4096
    D2 = biased_position_dim // 2

    B, L = 2, 8

    key = jax.random.PRNGKey(0)
    k_w, k_x = jax.random.split(key)

    # Deterministic parameter init (torch Linear(1, D2) weight shape: (D2, 1)).
    wt_weight = jax.random.uniform(k_w, (D2, 1), jnp.float32) * 2.0 - 1.0

    # Registered buffers.
    position = jnp.arange(0, max_len, dtype=jnp.float32)[:, None]            # (max_len, 1)
    div_term = jnp.exp(
        jnp.arange(0, biased_position_dim, 2, dtype=jnp.float32)
        * -(math.log(10000.0) / position_dim)
    )                                                                          # (D2,)

    interval = jax.random.uniform(k_x, (B, L), jnp.float32) * 5.0             # time deltas

    pe = biased_positional_embedding(interval, wt_weight, position, div_term)
    pe = jax.block_until_ready(pe)

    ref = _reference(interval, wt_weight, position, div_term)
    np.testing.assert_allclose(np.asarray(pe), np.asarray(ref), rtol=1e-5, atol=2e-5)

    print("KERNEL_OK")
</pallas_src>

<mosaic_0001>
module attributes {stable_mosaic.version = 11 : i64} {
  func.func @_biased_pe_kernel(%arg0: i32, %arg1: memref<2x8x1xf32, #tpu.memory_space<vmem>>, %arg2: memref<1x1x32xf32, #tpu.memory_space<vmem>>, %arg3: memref<1x8x32xf32, #tpu.memory_space<vmem>>, %arg4: memref<2x8x32xf32, #tpu.memory_space<vmem>>) attributes {dimension_semantics = [#tpu.dimension_semantics<parallel>], iteration_bounds = array<i64: 1>, scalar_prefetch = 0 : i64, scratch_operands = 0 : i64, tpu.core_type = #tpu.core_type<tc>, window_params = [{transform_indices = @transform_0, window_bounds = array<i64: 2, 8, 1>}, {pipeline_mode = #tpu.pipeline_mode<synchronous>, transform_indices = @transform_1, window_bounds = array<i64: 1, 1, 32>}, {transform_indices = @transform_2, window_bounds = array<i64: 1, 8, 32>}, {transform_indices = @transform_3, window_bounds = array<i64: 2, 8, 32>}]} {
    %c0 = arith.constant 0 : index
    %c0_0 = arith.constant 0 : index
    %c0_1 = arith.constant 0 : index
    %0 = vector.load %arg1[%c0, %c0_0, %c0_1] : memref<2x8x1xf32, #tpu.memory_space<vmem>>, vector<2x8x1xf32>
    %c0_2 = arith.constant 0 : index
    %c0_3 = arith.constant 0 : index
    %c0_4 = arith.constant 0 : index
    %1 = vector.load %arg2[%c0_2, %c0_3, %c0_4] : memref<1x1x32xf32, #tpu.memory_space<vmem>>, vector<1x1x32xf32>
    %2 = vector.broadcast %0 : vector<2x8x1xf32> to vector<2x8x32xf32>
    %3 = vector.broadcast %1 : vector<1x1x32xf32> to vector<2x8x32xf32>
    %4 = arith.mulf %2, %3 : vector<2x8x32xf32>
    %5 = math.tanh %4 : vector<2x8x32xf32>
    %cst = arith.constant 5.000000e-01 : f32
    %6 = vector.broadcast %cst : f32 to vector<2x8x32xf32>
    %7 = arith.mulf %6, %5 : vector<2x8x32xf32>
    %c0_5 = arith.constant 0 : index
    %c0_6 = arith.constant 0 : index
    %c0_7 = arith.constant 0 : index
    %8 = vector.load %arg3[%c0_5, %c0_6, %c0_7] : memref<1x8x32xf32, #tpu.memory_space<vmem>>, vector<1x8x32xf32>
    %9 = vector.broadcast %8 : vector<1x8x32xf32> to vector<2x8x32xf32>
    %10 = arith.addf %9, %7 : vector<2x8x32xf32>
    %11 = math.sin %10 : vector<2x8x32xf32>
    %c0_8 = arith.constant 0 : index
    %c0_9 = arith.constant 0 : index
    %c0_10 = arith.constant 0 : index
    %12 = vector.load %arg4[%c0_8, %c0_9, %c0_10] : memref<2x8x32xf32, #tpu.memory_space<vmem>>, vector<2x8x32xf32>
    tpu.vector_store %arg4[%c0_8, %c0_9, %c0_10], %11 {strides = array<i32>} : memref<2x8x32xf32, #tpu.memory_space<vmem>>, vector<2x8x32xf32>,
    return
  }
  func.func @transform_0(%arg0: i32) -> (i32, i32, i32) {
    %c0_i32 = arith.constant 0 : i32
    %c0_i32_0 = arith.constant 0 : i32
    %c0_i32_1 = arith.constant 0 : i32
    return %c0_i32, %arg0, %c0_i32_0 : i32, i32, i32
  }
  func.func @transform_1(%arg0: i32) -> (i32, i32, i32) {
    %c0_i32 = arith.constant 0 : i32
    %c0_i32_0 = arith.constant 0 : i32
    %c0_i32_1 = arith.constant 0 : i32
    %c0_i32_2 = arith.constant 0 : i32
    return %c0_i32, %c0_i32_0, %c0_i32_1 : i32, i32, i32
  }
  func.func @transform_2(%arg0: i32) -> (i32, i32, i32) {
    %c0_i32 = arith.constant 0 : i32
    %c0_i32_0 = arith.constant 0 : i32
    %c0_i32_1 = arith.constant 0 : i32
    return %c0_i32, %arg0, %c0_i32_0 : i32, i32, i32
  }
  func.func @transform_3(%arg0: i32) -> (i32, i32, i32) {
    %c0_i32 = arith.constant 0 : i32
    %c0_i32_0 = arith.constant 0 : i32
    %c0_i32_1 = arith.constant 0 : i32
    return %c0_i32, %arg0, %c0_i32_0 : i32, i32, i32
  }
}

</mosaic_0001>

<llo_original>
// kernel: tpu_custom_call.1
$region0: #{tpu_custom_call.1}
  #allocation0 [shape = 'u32[]', space=smem, size = 0x4, offset = 0x4, fixed_abs, tag = 'smem constant byte address 0x4 - core index']
  #allocation1 [shape = 'u32[144,128]{1,0:T(1,128)}', space=vmem, size = 0x12000, scoped, tag = 'internal scratch']
  %s0 = inlined_call_operand.vmem [shape: f32[2,8,1], index: 0, kind: input, shape index: {}]
  %s1 = inlined_call_operand.vmem [shape: f32[1,1,32], index: 1, kind: input, shape index: {}]
  %s2 = inlined_call_operand.vmem [shape: f32[1,8,32], index: 2, kind: input, shape index: {}]
  %s3 = inlined_call_operand.hbm [shape: f32[2,8,32], index: 3, kind: output, shape index: {}]
  %s4 = sld [smem:[#allocation0]]
  $region22: #{tpu_custom_call.1} parent=0
    _
  %s6 = ssub.s32 1, %s4
  %s7 = scalar_select 0, %s6, %s4
  $region1: #{tpu_custom_call.1} parent=0
    #allocation2 [shape = 'u8[8192]{0}', space=vmem, size = 0x2000, scoped, tag = 'output window, operand 0, single buffered']
    #allocation3 [shape = 's32[1]{0}', space=sflag, size = 0x4, scoped, tag = 'scoped memory for tpu_custom_call.1']
    %8 = vsyncpa [#allocation3], 0
    // Predicated region
    $region2: #{tpu_custom_call.1} parent=1 // pred_check
      _
    $region3: #{tpu_custom_call.1} parent=1 // pred_check_branch
      %10 = sbr.rel (0) target = $region5
    $region4: #{tpu_custom_call.1} parent=1 // pred_region
      _
    $region5: #{tpu_custom_call.1} parent=1 // pred_fallthru
      _
    // Predicated region
    $region6: #{tpu_custom_call.1} parent=1 // pred_check
      _
    $region7: #{tpu_custom_call.1} parent=1 // pred_check_branch
      %12 = sbr.rel (0) target = $region9
    $region8: #{tpu_custom_call.1} parent=1 // pred_region
      _
    $region9: #{tpu_custom_call.1} parent=1 // pred_fallthru
      _
    // Predicated region
    $region10: #{tpu_custom_call.1} parent=1 // pred_check
      _
    $region11: #{tpu_custom_call.1} parent=1 // pred_check_branch
      %14 = sbr.rel (0) target = $region13
    $region12: #{tpu_custom_call.1} parent=1 // pred_region
      _
    $region13: #{tpu_custom_call.1} parent=1 // pred_fallthru
      _
    %v15 = vld [vmem:[%s0] sm:$0xff]
    %v16 = vld [vmem:[%s0 + $0x8] sm:$0xff]
    %v17 = vld [vmem:[%s1] sm:$0x1]
    %19 = vset.pattern.permute.xlu0 0
    %20 = vperm.xlu0 %19, %v15
    %v21 = vpop.permute.xlu0 %20
    %24 = vset.pattern.permute.xlu0 0
    %25 = vperm.xlu0 %24, %v16
    %v26 = vpop.permute.xlu0 %25
    %v29 = vlaneseq
    %v30 = vshrl.u32 %v29, 7
    %v31 = vsub.s32 0, %v30
    %v32 = vrot.slane %v17, %v31
    %v34 = vmul.f32 %v21, %v32
    %v35 = vmul.f32 %v26, %v32
    %v36 = vtanh.pop %v34
    %v37 = vtanh.pop %v35
    %v38 = vmul.f32 %v36, 0.5
    %v39 = vmul.f32 %v37, 0.5
    %v40 = vld [vmem:[%s2] sm:$0xff]
    %v41 = vadd.f32 %v40, %v38
    %v42 = vadd.f32 %v40, %v39
    %v43 = vand.u32 2147483647, %v41
    %vm44 = vcmp.le.f32.partialorder %v43, 0.7853982
    %vm45 = vcmp.lt.s32.totalorder %v41, 0
    %v46 = vand.u32 %v41, 2139095040
    %v47 = vshrl.u32 %v46, 23
    %v48 = vsub.s32 %v47, 127
    %v49 = vand.u32 2147483647, %v41
    %v50 = vand.u32 %v49, 8388607
    %v51 = vor.u32 %v50, 8388608
    %v52 = vsub.s32 0, %v51
    %v53 = vadd.s32 %v48, 1
    %vm54 = vcmp.gt.s32.totalorder %v53, 0
    %v55 = vsel %vm54, %v53, 0
    %v56 = vshrl.u32 %v55, 5
    %v57 = vand.u32 %v55, 31
    %v58 = vsub.s32 32, %v57
    %v59 = vshrl.u32 683565275, %v58
    %v60 = vshll.u32 683565275, %v57
    %v61 = vshrl.u32 2475754826, %v58
    %v62 = vor.u32 %v60, %v61
    %v63 = vshll.u32 2475754826, %v57
    %v64 = vshrl.u32 2131351028, %v58
    %v65 = vor.u32 %v63, %v64
    %v66 = vshll.u32 2131351028, %v57
    %v67 = vshrl.u32 2102212464, %v58
    %v68 = vor.u32 %v66, %v67
    %v69 = vshll.u32 2102212464, %v57
    %v70 = vshrl.u32 920167782, %v58
    %v71 = vor.u32 %v69, %v70
    %v72 = vshll.u32 920167782, %v57
    %v73 = vshrl.u32 1326507024, %v58
    %v74 = vor.u32 %v72, %v73
    %vm75 = vcmp.lt.s32.totalorder %v56, 1
    %vm76 = vcmp.lt.s32.totalorder %v56, 2
    %vm77 = vcmp.lt.s32.totalorder %v56, 3
    %vm78 = vcmp.lt.s32.totalorder %v56, 4
    %v79 = vsel %vm75, %v59, %v62
    %v80 = vsel %vm78, %v68, 2102212464
    %v81 = vsel %vm77, %v65, %v80
    %v82 = vsel %vm76, %v79, %v81
    %v83 = vsel %vm75, %v62, %v65
    %v84 = vsel %vm78, %v71, 920167782
    %v85 = vsel %vm77, %v68, %v84
    %v86 = vsel %vm76, %v83, %v85
    %v87 = vsel %vm75, %v65, %v68
    %v88 = vsel %vm78, %v74, 1326507024
    %v89 = vsel %vm77, %v71, %v88
    %v90 = vsel %vm76, %v87, %v89
    %v91 = vshll.u32 %v51, 8
    %v92 = vmul.u32.u64.compose %v91, %v90
    %v93 = vextract.low.u32 %v92
    %v94 = vextract.high.u32 %v92
    %v95 = vmul.u32.u64.compose %v91, %v86
    %v96 = vextract.low.u32 %v95
    %v97 = vextract.high.u32 %v95
    %v98 = vmul.u32 %v91, %v82
    %v99 = vadd.s32 %v94, %v96
    %vm100 = vc.u32 %v94, %v96
    %v101 = vadd.s32 %v97, 1
    %v102 = vsel %vm100, %v101, %v97
    %v103 = vadd.s32 %v98, %v102
    %v104 = vadd.s32 %v103, 536870912
    %v105 = vshrl.u32 %v104, 30
    %v106 = vshll.u32 %v105, 30
    %v107 = vsub.s32 %v103, %v106
    %vm108 = vcmp.lt.s32.totalorder %v107, 0
    %v109 = vsub.s32 0, %v107
    %v110 = vsel %vm108, %v109, %v107
    %v111 = vclz %v110
    %v112 = vsub.s32 %v111, 2
    %vm113 = vcmp.gt.s32.totalorder 0, %v112
    %v114 = vsel %vm113, 0, %v112
    %v115 = vsub.s32 32, %v114
    %v116 = vshll.u32 %v107, %v114
    %v117 = vshrl.u32 %v99, %v115
    %v118 = vor.u32 %v116, %v117
    %v119 = vsub.s32 4294967266, %v114
    %v120 = vadd.s32 %v119, 127
    %v121 = vshll.u32 %v120, 23
    %v122 = vor.u32 4788187, %v121
    %v123 = vand.u32 2147483647, %v122
    %v125 = vcvt.s32.f32 %v118
    %v126 = vmul.f32 %v125, %v123
    %v127 = vxor.u32 %v126, 2147483648
    %v128 = vsel %vm45, %v127, %v126
    %v129 = vsub.s32 4, %v105
    %v130 = vsel %vm45, %v129, %v105
    %v131 = vsel %vm44, %v41, %v128
    %v132 = vsel %vm44, 0, %v130
    %v133 = vcosq.f32.pop %v131
    %v134 = vsinq.f32.pop %v131
    %vm135 = vweird.f32 %v41
    %v136 = vadd.s32 %v132, 3
    %v137 = vand.u32 %v136, 3
    %vm138 = vcmp.lt.s32.totalorder %v137, 2
    %vm139 = vcmp.eq.s32.totalorder %v137, 0
    %v140 = vxor.u32 %v134, 2147483648
    %v141 = vsel %vm139, %v133, %v140
    %vm142 = vcmp.eq.s32.totalorder %v137, 2
    %v143 = vxor.u32 %v133, 2147483648
    %v144 = vsel %vm142, %v143, %v134
    %v145 = vsel %vm138, %v141, %v144
    %v146 = vsel %vm135, nan, %v145
    %v147 = vand.u32 2147483647, %v42
    %vm148 = vcmp.le.f32.partialorder %v147, 0.7853982
    %vm149 = vcmp.lt.s32.totalorder %v42, 0
    %v150 = vand.u32 %v42, 2139095040
    %v151 = vshrl.u32 %v150, 23
    %v152 = vsub.s32 %v151, 127
    %v153 = vand.u32 2147483647, %v42
    %v154 = vand.u32 %v153, 8388607
    %v155 = vor.u32 %v154, 8388608
    %v156 = vsub.s32 0, %v155
    %v157 = vadd.s32 %v152, 1
    %vm158 = vcmp.gt.s32.totalorder %v157, 0
    %v159 = vsel %vm158, %v157, 0
    %v160 = vshrl.u32 %v159, 5
    %v161 = vand.u32 %v159, 31
    %v162 = vsub.s32 32, %v161
    %v163 = vshrl.u32 683565275, %v162
    %v164 = vshll.u32 683565275, %v161
    %v165 = vshrl.u32 2475754826, %v162
    %v166 = vor.u32 %v164, %v165
    %v167 = vshll.u32 2475754826, %v161
    %v168 = vshrl.u32 2131351028, %v162
    %v169 = vor.u32 %v167, %v168
    %v170 = vshll.u32 2131351028, %v161
    %v171 = vshrl.u32 2102212464, %v162
    %v172 = vor.u32 %v170, %v171
    %v173 = vshll.u32 2102212464, %v161
    %v174 = vshrl.u32 920167782, %v162
    %v175 = vor.u32 %v173, %v174
    %v176 = vshll.u32 920167782, %v161
    %v177 = vshrl.u32 1326507024, %v162
    %v178 = vor.u32 %v176, %v177
    %vm179 = vcmp.lt.s32.totalorder %v160, 1
    %vm180 = vcmp.lt.s32.totalorder %v160, 2
    %vm181 = vcmp.lt.s32.totalorder %v160, 3
    %vm182 = vcmp.lt.s32.totalorder %v160, 4
    %v183 = vsel %vm179, %v163, %v166
    %v184 = vsel %vm182, %v172, 2102212464
    %v185 = vsel %vm181, %v169, %v184
    %v186 = vsel %vm180, %v183, %v185
    %v187 = vsel %vm179, %v166, %v169
    %v188 = vsel %vm182, %v175, 920167782
    %v189 = vsel %vm181, %v172, %v188
    %v190 = vsel %vm180, %v187, %v189
    %v191 = vsel %vm179, %v169, %v172
    %v192 = vsel %vm182, %v178, 1326507024
    %v193 = vsel %vm181, %v175, %v192
    %v194 = vsel %vm180, %v191, %v193
    %v195 = vshll.u32 %v155, 8
    %v196 = vmul.u32.u64.compose %v195, %v194
    %v197 = vextract.low.u32 %v196
    %v198 = vextract.high.u32 %v196
    %v199 = vmul.u32.u64.compose %v195, %v190
    %v200 = vextract.low.u32 %v199
    %v201 = vextract.high.u32 %v199
    %v202 = vmul.u32 %v195, %v186
    %v203 = vadd.s32 %v198, %v200
    %vm204 = vc.u32 %v198, %v200
    %v205 = vadd.s32 %v201, 1
    %v206 = vsel %vm204, %v205, %v201
    %v207 = vadd.s32 %v202, %v206
    %v208 = vadd.s32 %v207, 536870912
    %v209 = vshrl.u32 %v208, 30
    %v210 = vshll.u32 %v209, 30
    %v211 = vsub.s32 %v207, %v210
    %vm212 = vcmp.lt.s32.totalorder %v211, 0
    %v213 = vsub.s32 0, %v211
    %v214 = vsel %vm212, %v213, %v211
    %v215 = vclz %v214
    %v216 = vsub.s32 %v215, 2
    %vm217 = vcmp.gt.s32.totalorder 0, %v216
    %v218 = vsel %vm217, 0, %v216
    %v219 = vsub.s32 32, %v218
    %v220 = vshll.u32 %v211, %v218
    %v221 = vshrl.u32 %v203, %v219
    %v222 = vor.u32 %v220, %v221
    %v223 = vsub.s32 4294967266, %v218
    %v224 = vadd.s32 %v223, 127
    %v225 = vshll.u32 %v224, 23
    %v226 = vor.u32 4788187, %v225
    %v227 = vand.u32 2147483647, %v226
    %v229 = vcvt.s32.f32 %v222
    %v230 = vmul.f32 %v229, %v227
    %v231 = vxor.u32 %v230, 2147483648
    %v232 = vsel %vm149, %v231, %v230
    %v233 = vsub.s32 4, %v209
    %v234 = vsel %vm149, %v233, %v209
    %v235 = vsel %vm148, %v42, %v232
    %v236 = vsel %vm148, 0, %v234
    %v237 = vcosq.f32.pop %v235
    %v238 = vsinq.f32.pop %v235
    %vm239 = vweird.f32 %v42
    %v240 = vadd.s32 %v236, 3
    %v241 = vand.u32 %v240, 3
    %vm242 = vcmp.lt.s32.totalorder %v241, 2
    %vm243 = vcmp.eq.s32.totalorder %v241, 0
    %v244 = vxor.u32 %v238, 2147483648
    %v245 = vsel %vm243, %v237, %v244
    %vm246 = vcmp.eq.s32.totalorder %v241, 2
    %v247 = vxor.u32 %v237, 2147483648
    %v248 = vsel %vm246, %v247, %v238
    %v249 = vsel %vm242, %v245, %v248
    %v250 = vsel %vm239, nan, %v249
    %vm251 = vcmask 261120
    %252 = vst.msk [vmem:[#allocation2] sm:$0xff] %vm251, %v146
    %253 = vst.msk [vmem:[#allocation2 + $0x8] sm:$0xff] %vm251, %v250
    // Predicated region
    $region14: #{tpu_custom_call.1} parent=1 // pred_check
      _
    $region15: #{tpu_custom_call.1} parent=1 // pred_check_branch
      %255 = sbr.rel (0) target = $region17
    $region16: #{tpu_custom_call.1} parent=1 // pred_region
      %s257 = ssub.s32 256, 256
      %258 = vsyncadd [#allocation3], %s257
      %s259 = sshll.u32 [#allocation2], 4
      %s260 = int_to_ptr.vmem [resolvable:$true] %s259
      %265 = dma.vmem_to_hbm [thread:$0]  %s260, 256, %s3, [#allocation3], 128, 128, 8
    $region17: #{tpu_custom_call.1} parent=1 // pred_fallthru
      _
    // Predicated region
    $region18: #{tpu_custom_call.1} parent=1 // pred_check
      _
    $region19: #{tpu_custom_call.1} parent=1 // pred_check_branch
      %267 = sbr.rel (0) target = $region21
    $region20: #{tpu_custom_call.1} parent=1 // pred_region
      %268 = dma.done [#allocation3], 256
    $region21: #{tpu_custom_call.1} parent=1 // pred_fallthru
      _
    %269 = vsyncpa [#allocation3], 1

</llo_original>
